<compile_context>
chip_gen: v7x
topology: tpu7x:2x2x1
jax: 0.10.0
libtpu: 0.0.40
codegen_flags: <defaults>
</compile_context>

<pallas_src>
import functools

import jax
import jax.numpy as jnp
from jax.experimental import pallas as pl
from jax.experimental.pallas import tpu as pltpu


K_BANDS = 8  # 8 bands x 32 features = 256 rows -> fills the v6e/v7x MXU


def _mlp_kernel(k, x_ref, w1_ref, b1_ref, w2_ref, b2_ref, w3_ref, b3_ref, o_ref):
    tbk = x_ref.shape[1]

    # Band r of the batch (sublane row r of x) -> 32 broadcast copies in rows
    # 32r..32r+31.  Pure load/VPU/XLU work; keeps the MXU free for layers 2/3.
    xk = jnp.concatenate(
        [jnp.broadcast_to(x_ref[pl.ds(r, 1), :], (32, tbk)) for r in range(k)],
        axis=0)                                                   # (32k, tbk)

    # Layer 1: Linear(1, 32) + ReLU.  K=1 contraction -> VPU broadcast FMA.
    h1 = jnp.maximum(w1_ref[...] * xk + b1_ref[...], 0.0)        # (32k, tbk)

    # Layer 2: Linear(32, 32) + ReLU.  Block-diagonal (32k, 32k) weight packs k
    # independent batch bands into one MXU dot with a full 256-wide contraction.
    h2 = jnp.dot(w2_ref[...], h1, preferred_element_type=jnp.float32)
    h2 = jnp.maximum(h2 + b2_ref[...], 0.0)                      # (32k, tbk)

    # Layer 3: Linear(32, 1).  Block-diagonal (k, 32k) weight -> lane-dense
    # (k, tbk) output tile.
    out = jnp.dot(w3_ref[...], h2, preferred_element_type=jnp.float32)
    o_ref[...] = (out + b3_ref[...]).astype(o_ref.dtype)


def temp_model_forward(x, params, *, batch_tile=16384, bands=K_BANDS):
    """x: (B, 1) float32. Returns (B, 1) float32, matching PyTorch TempModel."""
    B = x.shape[0]
    k = bands

    # Per-band lane tile: forced to a multiple of 128, >= 128.
    tbk_max = max(128, (batch_tile // k) // 128 * 128)
    Bk = pl.cdiv(B, k)                      # per-band batch length (unpadded)
    steps = pl.cdiv(Bk, tbk_max)
    # For big batches make sure there are >=2 grid steps so the "parallel"
    # axis can be sharded across v7x's two TensorCores (harmless on 1-TC chips).
    if steps == 1 and Bk > 8 * 128:
        steps = 2
    tbk = max(128, pl.cdiv(pl.cdiv(Bk, steps), 128) * 128)
    steps = pl.cdiv(Bk, tbk)
    Bpk = steps * tbk                       # padded per-band length
    Bp = k * Bpk                            # total padded batch

    # Band-pack the batch: element i -> (band i // Bpk, lane i % Bpk).
    xp = x.reshape(-1)
    if Bp != B:
        xp = jnp.pad(xp, (0, Bp - B))       # padded lanes sliced off below
    xp = xp.reshape(k, Bpk)

    # Host-side weight prep (tiny): tiled / block-diagonal copies, f32.
    f32 = jnp.float32
    eye_k = jnp.eye(k, dtype=f32)
    w1k = jnp.tile(params["w1"].astype(f32), (k, 1))                  # (32k, 1)
    b1k = jnp.tile(params["b1"].astype(f32).reshape(32, 1), (k, 1))   # (32k, 1)
    w2k = jnp.kron(eye_k, params["w2"].astype(f32))                   # (32k, 32k)
    b2k = jnp.tile(params["b2"].astype(f32).reshape(32, 1), (k, 1))   # (32k, 1)
    w3k = jnp.kron(eye_k, params["w3"].astype(f32))                   # (k, 32k)
    b3k = jnp.tile(params["b3"].astype(f32).reshape(1, 1), (k, 1))    # (k, 1)

    const = lambda i: (0, 0)                # weights stay VMEM-resident
    kernel = functools.partial(_mlp_kernel, k)

    out_packed = pl.pallas_call(
        kernel,
        out_shape=jax.ShapeDtypeStruct((k, Bpk), jnp.float32),
        grid=(steps,),
        in_specs=[
            pl.BlockSpec((k, tbk), lambda i: (0, i)),     # x tile, batch on lanes
            pl.BlockSpec((32 * k, 1), const),             # w1 (tiled)
            pl.BlockSpec((32 * k, 1), const),             # b1 (tiled)
            pl.BlockSpec((32 * k, 32 * k), const),        # w2 (block-diagonal)
            pl.BlockSpec((32 * k, 1), const),             # b2 (tiled)
            pl.BlockSpec((k, 32 * k), const),             # w3 (block-diagonal)
            pl.BlockSpec((k, 1), const),                  # b3 (tiled)
        ],
        out_specs=pl.BlockSpec((k, tbk), lambda i: (0, i)),
        compiler_params=pltpu.CompilerParams(
            dimension_semantics=("parallel",)),           # megacore shard on v7x
        cost_estimate=pl.CostEstimate(
            flops=2 * Bp * (32 + 32 * 32 + 32),
            transcendentals=0,
            bytes_accessed=4 * (2 * Bp + 32 * k * (32 * k + 4) + 2 * k)),
    )(xp, w1k, b1k, w2k, b2k, w3k, b3k)

    # TODO(synk): for large 128-aligned batches the pad/slice copies could be
    # dropped entirely by handling the ragged tail in-kernel with a prefetch scalar.
    return out_packed.reshape(-1)[:B].reshape(B, 1)


def init_params(key):
    """Deterministic synthetic params in PyTorch Linear (out, in) layout."""
    k1, k2, k3, k4, k5, k6 = jax.random.split(key, 6)
    return {
        "w1": jax.random.normal(k1, (32, 1), jnp.float32) * 0.5,
        "b1": jax.random.normal(k2, (32,), jnp.float32) * 0.1,
        "w2": jax.random.normal(k3, (32, 32), jnp.float32) * 0.1,
        "b2": jax.random.normal(k4, (32,), jnp.float32) * 0.1,
        "w3": jax.random.normal(k5, (1, 32), jnp.float32) * 0.1,
        "b3": jax.random.normal(k6, (1,), jnp.float32) * 0.1,
    }


def reference_forward(x, p):
    h1 = jnp.maximum(x @ p["w1"].T + p["b1"], 0.0)
    h2 = jnp.maximum(h1 @ p["w2"].T + p["b2"], 0.0)
    return h2 @ p["w3"].T + p["b3"]


if __name__ == "__main__":
    key = jax.random.PRNGKey(0)
    kx, kx2, kp = jax.random.split(key, 3)
    params = init_params(kp)

    # Small shape consistent with the module (Linear(1, ...)): batch = 8.
    x_small = jax.random.normal(kx, (8, 1), jnp.float32)
    out_small = jax.block_until_ready(temp_model_forward(x_small, params))
    ref_small = reference_forward(x_small, params)
    assert out_small.shape == (8, 1)
    assert jnp.allclose(out_small, ref_small, atol=1e-4, rtol=1e-4), "mismatch (B=8)"

    # Ragged batch exercising band packing + padding.
    x_rag = jax.random.normal(kx2, (300, 1), jnp.float32)
    out_rag = jax.block_until_ready(temp_model_forward(x_rag, params))
    ref_rag = reference_forward(x_rag, params)
    assert out_rag.shape == (300, 1)
    assert jnp.allclose(out_rag, ref_rag, atol=1e-4, rtol=1e-4), "mismatch (B=300)"

    print("KERNEL_OK")
</pallas_src>

<mosaic_0001>
module attributes {stable_mosaic.version = 11 : i64} {
  func.func @_mlp_kernel(%arg0: i32, %arg1: memref<8x128xf32, #tpu.memory_space<vmem>>, %arg2: memref<256x1xf32, #tpu.memory_space<vmem>>, %arg3: memref<256x1xf32, #tpu.memory_space<vmem>>, %arg4: memref<256x256xf32, #tpu.memory_space<vmem>>, %arg5: memref<256x1xf32, #tpu.memory_space<vmem>>, %arg6: memref<8x256xf32, #tpu.memory_space<vmem>>, %arg7: memref<8x1xf32, #tpu.memory_space<vmem>>, %arg8: memref<8x128xf32, #tpu.memory_space<vmem>>) attributes {dimension_semantics = [#tpu.dimension_semantics<parallel>], iteration_bounds = array<i64: 1>, scalar_prefetch = 0 : i64, scratch_operands = 0 : i64, tpu.core_type = #tpu.core_type<tc>, window_params = [{transform_indices = @transform_0, window_bounds = array<i64: 8, 128>}, {pipeline_mode = #tpu.pipeline_mode<synchronous>, transform_indices = @transform_1, window_bounds = array<i64: 256, 1>}, {pipeline_mode = #tpu.pipeline_mode<synchronous>, transform_indices = @transform_2, window_bounds = array<i64: 256, 1>}, {pipeline_mode = #tpu.pipeline_mode<synchronous>, transform_indices = @transform_3, window_bounds = array<i64: 256, 256>}, {pipeline_mode = #tpu.pipeline_mode<synchronous>, transform_indices = @transform_4, window_bounds = array<i64: 256, 1>}, {pipeline_mode = #tpu.pipeline_mode<synchronous>, transform_indices = @transform_5, window_bounds = array<i64: 8, 256>}, {pipeline_mode = #tpu.pipeline_mode<synchronous>, transform_indices = @transform_6, window_bounds = array<i64: 8, 1>}, {transform_indices = @transform_7, window_bounds = array<i64: 8, 128>}]} {
    %c0 = arith.constant 0 : index
    %c0_0 = arith.constant 0 : index
    %0 = vector.load %arg1[%c0, %c0_0] : memref<8x128xf32, #tpu.memory_space<vmem>>, vector<1x128xf32>
    %1 = vector.shape_cast %0 : vector<1x128xf32> to vector<1x128xf32>
    %2 = vector.broadcast %1 : vector<1x128xf32> to vector<32x128xf32>
    %c1 = arith.constant 1 : index
    %c0_1 = arith.constant 0 : index
    %3 = vector.load %arg1[%c1, %c0_1] : memref<8x128xf32, #tpu.memory_space<vmem>>, vector<1x128xf32>
    %4 = vector.shape_cast %3 : vector<1x128xf32> to vector<1x128xf32>
    %5 = vector.broadcast %4 : vector<1x128xf32> to vector<32x128xf32>
    %c2 = arith.constant 2 : index
    %c0_2 = arith.constant 0 : index
    %6 = vector.load %arg1[%c2, %c0_2] : memref<8x128xf32, #tpu.memory_space<vmem>>, vector<1x128xf32>
    %7 = vector.shape_cast %6 : vector<1x128xf32> to vector<1x128xf32>
    %8 = vector.broadcast %7 : vector<1x128xf32> to vector<32x128xf32>
    %c3 = arith.constant 3 : index
    %c0_3 = arith.constant 0 : index
    %9 = vector.load %arg1[%c3, %c0_3] : memref<8x128xf32, #tpu.memory_space<vmem>>, vector<1x128xf32>
    %10 = vector.shape_cast %9 : vector<1x128xf32> to vector<1x128xf32>
    %11 = vector.broadcast %10 : vector<1x128xf32> to vector<32x128xf32>
    %c4 = arith.constant 4 : index
    %c0_4 = arith.constant 0 : index
    %12 = vector.load %arg1[%c4, %c0_4] : memref<8x128xf32, #tpu.memory_space<vmem>>, vector<1x128xf32>
    %13 = vector.shape_cast %12 : vector<1x128xf32> to vector<1x128xf32>
    %14 = vector.broadcast %13 : vector<1x128xf32> to vector<32x128xf32>
    %c5 = arith.constant 5 : index
    %c0_5 = arith.constant 0 : index
    %15 = vector.load %arg1[%c5, %c0_5] : memref<8x128xf32, #tpu.memory_space<vmem>>, vector<1x128xf32>
    %16 = vector.shape_cast %15 : vector<1x128xf32> to vector<1x128xf32>
    %17 = vector.broadcast %16 : vector<1x128xf32> to vector<32x128xf32>
    %c6 = arith.constant 6 : index
    %c0_6 = arith.constant 0 : index
    %18 = vector.load %arg1[%c6, %c0_6] : memref<8x128xf32, #tpu.memory_space<vmem>>, vector<1x128xf32>
    %19 = vector.shape_cast %18 : vector<1x128xf32> to vector<1x128xf32>
    %20 = vector.broadcast %19 : vector<1x128xf32> to vector<32x128xf32>
    %c7 = arith.constant 7 : index
    %c0_7 = arith.constant 0 : index
    %21 = vector.load %arg1[%c7, %c0_7] : memref<8x128xf32, #tpu.memory_space<vmem>>, vector<1x128xf32>
    %22 = vector.shape_cast %21 : vector<1x128xf32> to vector<1x128xf32>
    %23 = vector.broadcast %22 : vector<1x128xf32> to vector<32x128xf32>
    %24 = tpu.concatenate %2, %5, %8, %11, %14, %17, %20, %23 in 0 : vector<32x128xf32>, vector<32x128xf32>, vector<32x128xf32>, vector<32x128xf32>, vector<32x128xf32>, vector<32x128xf32>, vector<32x128xf32>, vector<32x128xf32> -> vector<256x128xf32>
    %c0_8 = arith.constant 0 : index
    %c0_9 = arith.constant 0 : index
    %25 = vector.load %arg2[%c0_8, %c0_9] : memref<256x1xf32, #tpu.memory_space<vmem>>, vector<256x1xf32>
    %26 = vector.broadcast %25 : vector<256x1xf32> to vector<256x128xf32>
    %27 = arith.mulf %26, %24 : vector<256x128xf32>
    %c0_10 = arith.constant 0 : index
    %c0_11 = arith.constant 0 : index
    %28 = vector.load %arg3[%c0_10, %c0_11] : memref<256x1xf32, #tpu.memory_space<vmem>>, vector<256x1xf32>
    %29 = vector.broadcast %28 : vector<256x1xf32> to vector<256x128xf32>
    %30 = arith.addf %27, %29 : vector<256x128xf32>
    %cst = arith.constant 0.000000e+00 : f32
    %31 = vector.broadcast %cst : f32 to vector<256x128xf32>
    %32 = arith.maximumf %30, %31 : vector<256x128xf32>
    %c0_12 = arith.constant 0 : index
    %c0_13 = arith.constant 0 : index
    %33 = vector.load %arg4[%c0_12, %c0_13] : memref<256x256xf32, #tpu.memory_space<vmem>>, vector<256x256xf32>
    %cst_14 = arith.constant dense<0.000000e+00> : vector<256x128xf32>
    %34 = tpu.matmul %33, %32, %cst_14 {dimension_numbers = #tpu.dot_dimension_numbers<[1], [0], [0], [1], [0, 0, 1, 1], [], []>} : vector<256x256xf32>, vector<256x128xf32>, vector<256x128xf32> -> vector<256x128xf32>
    %c0_15 = arith.constant 0 : index
    %c0_16 = arith.constant 0 : index
    %35 = vector.load %arg5[%c0_15, %c0_16] : memref<256x1xf32, #tpu.memory_space<vmem>>, vector<256x1xf32>
    %36 = vector.broadcast %35 : vector<256x1xf32> to vector<256x128xf32>
    %37 = arith.addf %34, %36 : vector<256x128xf32>
    %cst_17 = arith.constant 0.000000e+00 : f32
    %38 = vector.broadcast %cst_17 : f32 to vector<256x128xf32>
    %39 = arith.maximumf %37, %38 : vector<256x128xf32>
    %c0_18 = arith.constant 0 : index
    %c0_19 = arith.constant 0 : index
    %40 = vector.load %arg6[%c0_18, %c0_19] : memref<8x256xf32, #tpu.memory_space<vmem>>, vector<8x256xf32>
    %cst_20 = arith.constant dense<0.000000e+00> : vector<8x128xf32>
    %41 = tpu.matmul %40, %39, %cst_20 {dimension_numbers = #tpu.dot_dimension_numbers<[1], [0], [0], [1], [0, 0, 1, 1], [], []>} : vector<8x256xf32>, vector<256x128xf32>, vector<8x128xf32> -> vector<8x128xf32>
    %c0_21 = arith.constant 0 : index
    %c0_22 = arith.constant 0 : index
    %42 = vector.load %arg7[%c0_21, %c0_22] : memref<8x1xf32, #tpu.memory_space<vmem>>, vector<8x1xf32>
    %43 = vector.broadcast %42 : vector<8x1xf32> to vector<8x128xf32>
    %44 = arith.addf %41, %43 : vector<8x128xf32>
    %c0_23 = arith.constant 0 : index
    %c0_24 = arith.constant 0 : index
    %45 = vector.load %arg8[%c0_23, %c0_24] : memref<8x128xf32, #tpu.memory_space<vmem>>, vector<8x128xf32>
    tpu.vector_store %arg8[%c0_23, %c0_24], %44 {strides = array<i32>} : memref<8x128xf32, #tpu.memory_space<vmem>>, vector<8x128xf32>,
    return
  }
  func.func @transform_0(%arg0: i32) -> (i32, i32) {
    %c0_i32 = arith.constant 0 : i32
    %c0_i32_0 = arith.constant 0 : i32
    return %c0_i32, %arg0 : i32, i32
  }
  func.func @transform_1(%arg0: i32) -> (i32, i32) {
    %c0_i32 = arith.constant 0 : i32
    %c0_i32_0 = arith.constant 0 : i32
    %c0_i32_1 = arith.constant 0 : i32
    return %c0_i32, %c0_i32_0 : i32, i32
  }
  func.func @transform_2(%arg0: i32) -> (i32, i32) {
    %c0_i32 = arith.constant 0 : i32
    %c0_i32_0 = arith.constant 0 : i32
    %c0_i32_1 = arith.constant 0 : i32
    return %c0_i32, %c0_i32_0 : i32, i32
  }
  func.func @transform_3(%arg0: i32) -> (i32, i32) {
    %c0_i32 = arith.constant 0 : i32
    %c0_i32_0 = arith.constant 0 : i32
    %c0_i32_1 = arith.constant 0 : i32
    return %c0_i32, %c0_i32_0 : i32, i32
  }
  func.func @transform_4(%arg0: i32) -> (i32, i32) {
    %c0_i32 = arith.constant 0 : i32
    %c0_i32_0 = arith.constant 0 : i32
    %c0_i32_1 = arith.constant 0 : i32
    return %c0_i32, %c0_i32_0 : i32, i32
  }
  func.func @transform_5(%arg0: i32) -> (i32, i32) {
    %c0_i32 = arith.constant 0 : i32
    %c0_i32_0 = arith.constant 0 : i32
    %c0_i32_1 = arith.constant 0 : i32
    return %c0_i32, %c0_i32_0 : i32, i32
  }
  func.func @transform_6(%arg0: i32) -> (i32, i32) {
    %c0_i32 = arith.constant 0 : i32
    %c0_i32_0 = arith.constant 0 : i32
    %c0_i32_1 = arith.constant 0 : i32
    return %c0_i32, %c0_i32_0 : i32, i32
  }
  func.func @transform_7(%arg0: i32) -> (i32, i32) {
    %c0_i32 = arith.constant 0 : i32
    %c0_i32_0 = arith.constant 0 : i32
    return %c0_i32, %arg0 : i32, i32
  }
}

</mosaic_0001>

<llo_original>
// kernel: tpu_custom_call.1
$region0: #{tpu_custom_call.1}
  #allocation0 [shape = 'u32[]', space=smem, size = 0x4, offset = 0x4, fixed_abs, tag = 'smem constant byte address 0x4 - core index']
  #allocation1 [shape = 'u32[144,128]{1,0:T(1,128)}', space=vmem, size = 0x12000, scoped, tag = 'internal scratch']
  %s0 = inlined_call_operand.vmem [shape: f32[8,128], index: 0, kind: input, shape index: {}]
  %s1 = inlined_call_operand.vmem [shape: f32[256,1], index: 1, kind: input, shape index: {}]
  %s2 = inlined_call_operand.vmem [shape: f32[256,1], index: 2, kind: input, shape index: {}]
  %s3 = inlined_call_operand.vmem [shape: f32[256,256], index: 3, kind: input, shape index: {}]
  %s4 = inlined_call_operand.vmem [shape: f32[256,1], index: 4, kind: input, shape index: {}]
  %s5 = inlined_call_operand.vmem [shape: f32[8,256], index: 5, kind: input, shape index: {}]
  %s6 = inlined_call_operand.vmem [shape: f32[8,1], index: 6, kind: input, shape index: {}]
  %s7 = inlined_call_operand.hbm [shape: f32[8,128], index: 7, kind: output, shape index: {}]
  %s8 = sld [smem:[#allocation0]]
  $region38: #{tpu_custom_call.1} parent=0
    _
  %s10 = ssub.s32 1, %s8
  %s11 = scalar_select 0, %s10, %s8
  $region1: #{tpu_custom_call.1} parent=0
    #allocation2 [shape = 'u8[4096]{0}', space=vmem, size = 0x1000, scoped, tag = 'output window, operand 0, single buffered']
    #allocation3 [shape = 's32[1]{0}', space=sflag, size = 0x4, scoped, tag = 'scoped memory for tpu_custom_call.1']
    %12 = vsyncpa [#allocation3], 0
    // Predicated region
    $region2: #{tpu_custom_call.1} parent=1 // pred_check
      _
    $region3: #{tpu_custom_call.1} parent=1 // pred_check_branch
      %14 = sbr.rel (0) target = $region5
    $region4: #{tpu_custom_call.1} parent=1 // pred_region
      _
    $region5: #{tpu_custom_call.1} parent=1 // pred_fallthru
      _
    // Predicated region
    $region6: #{tpu_custom_call.1} parent=1 // pred_check
      _
    $region7: #{tpu_custom_call.1} parent=1 // pred_check_branch
      %16 = sbr.rel (0) target = $region9
    $region8: #{tpu_custom_call.1} parent=1 // pred_region
      _
    $region9: #{tpu_custom_call.1} parent=1 // pred_fallthru
      _
    // Predicated region
    $region10: #{tpu_custom_call.1} parent=1 // pred_check
      _
    $region11: #{tpu_custom_call.1} parent=1 // pred_check_branch
      %18 = sbr.rel (0) target = $region13
    $region12: #{tpu_custom_call.1} parent=1 // pred_region
      _
    $region13: #{tpu_custom_call.1} parent=1 // pred_fallthru
      _
    // Predicated region
    $region14: #{tpu_custom_call.1} parent=1 // pred_check
      _
    $region15: #{tpu_custom_call.1} parent=1 // pred_check_branch
      %20 = sbr.rel (0) target = $region17
    $region16: #{tpu_custom_call.1} parent=1 // pred_region
      _
    $region17: #{tpu_custom_call.1} parent=1 // pred_fallthru
      _
    // Predicated region
    $region18: #{tpu_custom_call.1} parent=1 // pred_check
      _
    $region19: #{tpu_custom_call.1} parent=1 // pred_check_branch
      %22 = sbr.rel (0) target = $region21
    $region20: #{tpu_custom_call.1} parent=1 // pred_region
      _
    $region21: #{tpu_custom_call.1} parent=1 // pred_fallthru
      _
    // Predicated region
    $region22: #{tpu_custom_call.1} parent=1 // pred_check
      _
    $region23: #{tpu_custom_call.1} parent=1 // pred_check_branch
      %24 = sbr.rel (0) target = $region25
    $region24: #{tpu_custom_call.1} parent=1 // pred_region
      _
    $region25: #{tpu_custom_call.1} parent=1 // pred_fallthru
      _
    // Predicated region
    $region26: #{tpu_custom_call.1} parent=1 // pred_check
      _
    $region27: #{tpu_custom_call.1} parent=1 // pred_check_branch
      %26 = sbr.rel (0) target = $region29
    $region28: #{tpu_custom_call.1} parent=1 // pred_region
      _
    $region29: #{tpu_custom_call.1} parent=1 // pred_fallthru
      _
    %v27 = vld [vmem:[%s0] sm:$0x1]
    %v28 = vlaneseq
    %v29 = vshrl.u32 %v28, 7
    %v30 = vsub.s32 0, %v29
    %v31 = vrot.slane %v27, %v30
    %v32 = vld [vmem:[%s0 + $0x1] sm:$0x1]
    %v33 = vlaneseq
    %v34 = vshrl.u32 %v33, 7
    %v35 = vsub.s32 0, %v34
    %v36 = vrot.slane %v32, %v35
    %v37 = vld [vmem:[%s0 + $0x2] sm:$0x1]
    %v38 = vlaneseq
    %v39 = vshrl.u32 %v38, 7
    %v40 = vsub.s32 0, %v39
    %v41 = vrot.slane %v37, %v40
    %v42 = vld [vmem:[%s0 + $0x3] sm:$0x1]
    %v43 = vlaneseq
    %v44 = vshrl.u32 %v43, 7
    %v45 = vsub.s32 0, %v44
    %v46 = vrot.slane %v42, %v45
    %v47 = vld [vmem:[%s0 + $0x4] sm:$0x1]
    %v48 = vlaneseq
    %v49 = vshrl.u32 %v48, 7
    %v50 = vsub.s32 0, %v49
    %v51 = vrot.slane %v47, %v50
    %v52 = vld [vmem:[%s0 + $0x5] sm:$0x1]
    %v53 = vlaneseq
    %v54 = vshrl.u32 %v53, 7
    %v55 = vsub.s32 0, %v54
    %v56 = vrot.slane %v52, %v55
    %v57 = vld [vmem:[%s0 + $0x6] sm:$0x1]
    %v58 = vlaneseq
    %v59 = vshrl.u32 %v58, 7
    %v60 = vsub.s32 0, %v59
    %v61 = vrot.slane %v57, %v60
    %v62 = vld [vmem:[%s0 + $0x7] sm:$0x1]
    %v63 = vlaneseq
    %v64 = vshrl.u32 %v63, 7
    %v65 = vsub.s32 0, %v64
    %v66 = vrot.slane %v62, %v65
    %v67 = vld [vmem:[%s1] sm:$0xff]
    %v68 = vld [vmem:[%s1 + $0x8] sm:$0xff]
    %v69 = vld [vmem:[%s1 + $0x10] sm:$0xff]
    %v70 = vld [vmem:[%s1 + $0x18] sm:$0xff]
    %v71 = vld [vmem:[%s1 + $0x20] sm:$0xff]
    %v72 = vld [vmem:[%s1 + $0x28] sm:$0xff]
    %v73 = vld [vmem:[%s1 + $0x30] sm:$0xff]
    %v74 = vld [vmem:[%s1 + $0x38] sm:$0xff]
    %v75 = vld [vmem:[%s1 + $0x40] sm:$0xff]
    %v76 = vld [vmem:[%s1 + $0x48] sm:$0xff]
    %v77 = vld [vmem:[%s1 + $0x50] sm:$0xff]
    %v78 = vld [vmem:[%s1 + $0x58] sm:$0xff]
    %v79 = vld [vmem:[%s1 + $0x60] sm:$0xff]
    %v80 = vld [vmem:[%s1 + $0x68] sm:$0xff]
    %v81 = vld [vmem:[%s1 + $0x70] sm:$0xff]
    %v82 = vld [vmem:[%s1 + $0x78] sm:$0xff]
    %v83 = vld [vmem:[%s1 + $0x80] sm:$0xff]
    %v84 = vld [vmem:[%s1 + $0x88] sm:$0xff]
    %v85 = vld [vmem:[%s1 + $0x90] sm:$0xff]
    %v86 = vld [vmem:[%s1 + $0x98] sm:$0xff]
    %v87 = vld [vmem:[%s1 + $0xa0] sm:$0xff]
    %v88 = vld [vmem:[%s1 + $0xa8] sm:$0xff]
    %v89 = vld [vmem:[%s1 + $0xb0] sm:$0xff]
    %v90 = vld [vmem:[%s1 + $0xb8] sm:$0xff]
    %v91 = vld [vmem:[%s1 + $0xc0] sm:$0xff]
    %v92 = vld [vmem:[%s1 + $0xc8] sm:$0xff]
    %v93 = vld [vmem:[%s1 + $0xd0] sm:$0xff]
    %v94 = vld [vmem:[%s1 + $0xd8] sm:$0xff]
    %v95 = vld [vmem:[%s1 + $0xe0] sm:$0xff]
    %v96 = vld [vmem:[%s1 + $0xe8] sm:$0xff]
    %v97 = vld [vmem:[%s1 + $0xf0] sm:$0xff]
    %v98 = vld [vmem:[%s1 + $0xf8] sm:$0xff]
    %100 = vset.pattern.permute.xlu0 0
    %101 = vperm.xlu0 %100, %v67
    %v102 = vpop.permute.xlu0 %101
    %105 = vset.pattern.permute.xlu0 0
    %106 = vperm.xlu0 %105, %v68
    %v107 = vpop.permute.xlu0 %106
    %110 = vset.pattern.permute.xlu0 0
    %111 = vperm.xlu0 %110, %v69
    %v112 = vpop.permute.xlu0 %111
    %115 = vset.pattern.permute.xlu0 0
    %116 = vperm.xlu0 %115, %v70
    %v117 = vpop.permute.xlu0 %116
    %120 = vset.pattern.permute.xlu0 0
    %121 = vperm.xlu0 %120, %v71
    %v122 = vpop.permute.xlu0 %121
    %125 = vset.pattern.permute.xlu0 0
    %126 = vperm.xlu0 %125, %v72
    %v127 = vpop.permute.xlu0 %126
    %130 = vset.pattern.permute.xlu0 0
    %131 = vperm.xlu0 %130, %v73
    %v132 = vpop.permute.xlu0 %131
    %135 = vset.pattern.permute.xlu0 0
    %136 = vperm.xlu0 %135, %v74
    %v137 = vpop.permute.xlu0 %136
    %140 = vset.pattern.permute.xlu0 0
    %141 = vperm.xlu0 %140, %v75
    %v142 = vpop.permute.xlu0 %141
    %145 = vset.pattern.permute.xlu0 0
    %146 = vperm.xlu0 %145, %v76
    %v147 = vpop.permute.xlu0 %146
    %150 = vset.pattern.permute.xlu0 0
    %151 = vperm.xlu0 %150, %v77
    %v152 = vpop.permute.xlu0 %151
    %155 = vset.pattern.permute.xlu0 0
    %156 = vperm.xlu0 %155, %v78
    %v157 = vpop.permute.xlu0 %156
    %160 = vset.pattern.permute.xlu0 0
    %161 = vperm.xlu0 %160, %v79
    %v162 = vpop.permute.xlu0 %161
    %165 = vset.pattern.permute.xlu0 0
    %166 = vperm.xlu0 %165, %v80
    %v167 = vpop.permute.xlu0 %166
    %170 = vset.pattern.permute.xlu0 0
    %171 = vperm.xlu0 %170, %v81
    %v172 = vpop.permute.xlu0 %171
    %175 = vset.pattern.permute.xlu0 0
    %176 = vperm.xlu0 %175, %v82
    %v177 = vpop.permute.xlu0 %176
    %180 = vset.pattern.permute.xlu0 0
    %181 = vperm.xlu0 %180, %v83
    %v182 = vpop.permute.xlu0 %181
    %185 = vset.pattern.permute.xlu0 0
    %186 = vperm.xlu0 %185, %v84
    %v187 = vpop.permute.xlu0 %186
    %190 = vset.pattern.permute.xlu0 0
    %191 = vperm.xlu0 %190, %v85
    %v192 = vpop.permute.xlu0 %191
    %195 = vset.pattern.permute.xlu0 0
    %196 = vperm.xlu0 %195, %v86
    %v197 = vpop.permute.xlu0 %196
    %200 = vset.pattern.permute.xlu0 0
    %201 = vperm.xlu0 %200, %v87
    %v202 = vpop.permute.xlu0 %201
    %205 = vset.pattern.permute.xlu0 0
    %206 = vperm.xlu0 %205, %v88
    %v207 = vpop.permute.xlu0 %206
    %210 = vset.pattern.permute.xlu0 0
    %211 = vperm.xlu0 %210, %v89
    %v212 = vpop.permute.xlu0 %211
    %215 = vset.pattern.permute.xlu0 0
    %216 = vperm.xlu0 %215, %v90
    %v217 = vpop.permute.xlu0 %216
    %220 = vset.pattern.permute.xlu0 0
    %221 = vperm.xlu0 %220, %v91
    %v222 = vpop.permute.xlu0 %221
    %225 = vset.pattern.permute.xlu0 0
    %226 = vperm.xlu0 %225, %v92
    %v227 = vpop.permute.xlu0 %226
    %230 = vset.pattern.permute.xlu0 0
    %231 = vperm.xlu0 %230, %v93
    %v232 = vpop.permute.xlu0 %231
    %235 = vset.pattern.permute.xlu0 0
    %236 = vperm.xlu0 %235, %v94
    %v237 = vpop.permute.xlu0 %236
    %240 = vset.pattern.permute.xlu0 0
    %241 = vperm.xlu0 %240, %v95
    %v242 = vpop.permute.xlu0 %241
    %245 = vset.pattern.permute.xlu0 0
    %246 = vperm.xlu0 %245, %v96
    %v247 = vpop.permute.xlu0 %246
    %250 = vset.pattern.permute.xlu0 0
    %251 = vperm.xlu0 %250, %v97
    %v252 = vpop.permute.xlu0 %251
    %255 = vset.pattern.permute.xlu0 0
    %256 = vperm.xlu0 %255, %v98
    %v257 = vpop.permute.xlu0 %256
    %v259 = vmul.f32 %v102, %v31
    %v260 = vmul.f32 %v107, %v31
    %v261 = vmul.f32 %v112, %v31
    %v262 = vmul.f32 %v117, %v31
    %v263 = vmul.f32 %v122, %v36
    %v264 = vmul.f32 %v127, %v36
    %v265 = vmul.f32 %v132, %v36
    %v266 = vmul.f32 %v137, %v36
    %v267 = vmul.f32 %v142, %v41
    %v268 = vmul.f32 %v147, %v41
    %v269 = vmul.f32 %v152, %v41
    %v270 = vmul.f32 %v157, %v41
    %v271 = vmul.f32 %v162, %v46
    %v272 = vmul.f32 %v167, %v46
    %v273 = vmul.f32 %v172, %v46
    %v274 = vmul.f32 %v177, %v46
    %v275 = vmul.f32 %v182, %v51
    %v276 = vmul.f32 %v187, %v51
    %v277 = vmul.f32 %v192, %v51
    %v278 = vmul.f32 %v197, %v51
    %v279 = vmul.f32 %v202, %v56
    %v280 = vmul.f32 %v207, %v56
    %v281 = vmul.f32 %v212, %v56
    %v282 = vmul.f32 %v217, %v56
    %v283 = vmul.f32 %v222, %v61
    %v284 = vmul.f32 %v227, %v61
    %v285 = vmul.f32 %v232, %v61
    %v286 = vmul.f32 %v237, %v61
    %v287 = vmul.f32 %v242, %v66
    %v288 = vmul.f32 %v247, %v66
    %v289 = vmul.f32 %v252, %v66
    %v290 = vmul.f32 %v257, %v66
    %v291 = vld [vmem:[%s2] sm:$0xff]
    %v292 = vld [vmem:[%s2 + $0x8] sm:$0xff]
    %v293 = vld [vmem:[%s2 + $0x10] sm:$0xff]
    %v294 = vld [vmem:[%s2 + $0x18] sm:$0xff]
    %v295 = vld [vmem:[%s2 + $0x20] sm:$0xff]
    %v296 = vld [vmem:[%s2 + $0x28] sm:$0xff]
    %v297 = vld [vmem:[%s2 + $0x30] sm:$0xff]
    %v298 = vld [vmem:[%s2 + $0x38] sm:$0xff]
    %v299 = vld [vmem:[%s2 + $0x40] sm:$0xff]
    %v300 = vld [vmem:[%s2 + $0x48] sm:$0xff]
    %v301 = vld [vmem:[%s2 + $0x50] sm:$0xff]
    %v302 = vld [vmem:[%s2 + $0x58] sm:$0xff]
    %v303 = vld [vmem:[%s2 + $0x60] sm:$0xff]
    %v304 = vld [vmem:[%s2 + $0x68] sm:$0xff]
    %v305 = vld [vmem:[%s2 + $0x70] sm:$0xff]
    %v306 = vld [vmem:[%s2 + $0x78] sm:$0xff]
    %v307 = vld [vmem:[%s2 + $0x80] sm:$0xff]
    %v308 = vld [vmem:[%s2 + $0x88] sm:$0xff]
    %v309 = vld [vmem:[%s2 + $0x90] sm:$0xff]
    %v310 = vld [vmem:[%s2 + $0x98] sm:$0xff]
    %v311 = vld [vmem:[%s2 + $0xa0] sm:$0xff]
    %v312 = vld [vmem:[%s2 + $0xa8] sm:$0xff]
    %v313 = vld [vmem:[%s2 + $0xb0] sm:$0xff]
    %v314 = vld [vmem:[%s2 + $0xb8] sm:$0xff]
    %v315 = vld [vmem:[%s2 + $0xc0] sm:$0xff]
    %v316 = vld [vmem:[%s2 + $0xc8] sm:$0xff]
    %v317 = vld [vmem:[%s2 + $0xd0] sm:$0xff]
    %v318 = vld [vmem:[%s2 + $0xd8] sm:$0xff]
    %v319 = vld [vmem:[%s2 + $0xe0] sm:$0xff]
    %v320 = vld [vmem:[%s2 + $0xe8] sm:$0xff]
    %v321 = vld [vmem:[%s2 + $0xf0] sm:$0xff]
    %v322 = vld [vmem:[%s2 + $0xf8] sm:$0xff]
    %324 = vset.pattern.permute.xlu0 0
    %325 = vperm.xlu0 %324, %v291
    %v326 = vpop.permute.xlu0 %325
    %329 = vset.pattern.permute.xlu0 0
    %330 = vperm.xlu0 %329, %v292
    %v331 = vpop.permute.xlu0 %330
    %334 = vset.pattern.permute.xlu0 0
    %335 = vperm.xlu0 %334, %v293
    %v336 = vpop.permute.xlu0 %335
    %339 = vset.pattern.permute.xlu0 0
    %340 = vperm.xlu0 %339, %v294
    %v341 = vpop.permute.xlu0 %340
    %344 = vset.pattern.permute.xlu0 0
    %345 = vperm.xlu0 %344, %v295
    %v346 = vpop.permute.xlu0 %345
    %349 = vset.pattern.permute.xlu0 0
    %350 = vperm.xlu0 %349, %v296
    %v351 = vpop.permute.xlu0 %350
    %354 = vset.pattern.permute.xlu0 0
    %355 = vperm.xlu0 %354, %v297
    %v356 = vpop.permute.xlu0 %355
    %359 = vset.pattern.permute.xlu0 0
    %360 = vperm.xlu0 %359, %v298
    %v361 = vpop.permute.xlu0 %360
    %364 = vset.pattern.permute.xlu0 0
    %365 = vperm.xlu0 %364, %v299
    %v366 = vpop.permute.xlu0 %365
    %369 = vset.pattern.permute.xlu0 0
    %370 = vperm.xlu0 %369, %v300
    %v371 = vpop.permute.xlu0 %370
    %374 = vset.pattern.permute.xlu0 0
    %375 = vperm.xlu0 %374, %v301
    %v376 = vpop.permute.xlu0 %375
    %379 = vset.pattern.permute.xlu0 0
    %380 = vperm.xlu0 %379, %v302
    %v381 = vpop.permute.xlu0 %380
    %384 = vset.pattern.permute.xlu0 0
    %385 = vperm.xlu0 %384, %v303
    %v386 = vpop.permute.xlu0 %385
    %389 = vset.pattern.permute.xlu0 0
    %390 = vperm.xlu0 %389, %v304
    %v391 = vpop.permute.xlu0 %390
    %394 = vset.pattern.permute.xlu0 0
    %395 = vperm.xlu0 %394, %v305
    %v396 = vpop.permute.xlu0 %395
    %399 = vset.pattern.permute.xlu0 0
    %400 = vperm.xlu0 %399, %v306
    %v401 = vpop.permute.xlu0 %400
    %404 = vset.pattern.permute.xlu0 0
    %405 = vperm.xlu0 %404, %v307
    %v406 = vpop.permute.xlu0 %405
    %409 = vset.pattern.permute.xlu0 0
    %410 = vperm.xlu0 %409, %v308
    %v411 = vpop.permute.xlu0 %410
    %414 = vset.pattern.permute.xlu0 0
    %415 = vperm.xlu0 %414, %v309
    %v416 = vpop.permute.xlu0 %415
    %419 = vset.pattern.permute.xlu0 0
    %420 = vperm.xlu0 %419, %v310
    %v421 = vpop.permute.xlu0 %420
    %424 = vset.pattern.permute.xlu0 0
    %425 = vperm.xlu0 %424, %v311
    %v426 = vpop.permute.xlu0 %425
    %429 = vset.pattern.permute.xlu0 0
    %430 = vperm.xlu0 %429, %v312
    %v431 = vpop.permute.xlu0 %430
    %434 = vset.pattern.permute.xlu0 0
    %435 = vperm.xlu0 %434, %v313
    %v436 = vpop.permute.xlu0 %435
    %439 = vset.pattern.permute.xlu0 0
    %440 = vperm.xlu0 %439, %v314
    %v441 = vpop.permute.xlu0 %440
    %444 = vset.pattern.permute.xlu0 0
    %445 = vperm.xlu0 %444, %v315
    %v446 = vpop.permute.xlu0 %445
    %449 = vset.pattern.permute.xlu0 0
    %450 = vperm.xlu0 %449, %v316
    %v451 = vpop.permute.xlu0 %450
    %454 = vset.pattern.permute.xlu0 0
    %455 = vperm.xlu0 %454, %v317
    %v456 = vpop.permute.xlu0 %455
    %459 = vset.pattern.permute.xlu0 0
    %460 = vperm.xlu0 %459, %v318
    %v461 = vpop.permute.xlu0 %460
    %464 = vset.pattern.permute.xlu0 0
    %465 = vperm.xlu0 %464, %v319
    %v466 = vpop.permute.xlu0 %465
    %469 = vset.pattern.permute.xlu0 0
    %470 = vperm.xlu0 %469, %v320
    %v471 = vpop.permute.xlu0 %470
    %474 = vset.pattern.permute.xlu0 0
    %475 = vperm.xlu0 %474, %v321
    %v476 = vpop.permute.xlu0 %475
    %479 = vset.pattern.permute.xlu0 0
    %480 = vperm.xlu0 %479, %v322
    %v481 = vpop.permute.xlu0 %480
    %v483 = vadd.f32 %v259, %v326
    %v484 = vadd.f32 %v260, %v331
    %v485 = vadd.f32 %v261, %v336
    %v486 = vadd.f32 %v262, %v341
    %v487 = vadd.f32 %v263, %v346
    %v488 = vadd.f32 %v264, %v351
    %v489 = vadd.f32 %v265, %v356
    %v490 = vadd.f32 %v266, %v361
    %v491 = vadd.f32 %v267, %v366
    %v492 = vadd.f32 %v268, %v371
    %v493 = vadd.f32 %v269, %v376
    %v494 = vadd.f32 %v270, %v381
    %v495 = vadd.f32 %v271, %v386
    %v496 = vadd.f32 %v272, %v391
    %v497 = vadd.f32 %v273, %v396
    %v498 = vadd.f32 %v274, %v401
    %v499 = vadd.f32 %v275, %v406
    %v500 = vadd.f32 %v276, %v411
    %v501 = vadd.f32 %v277, %v416
    %v502 = vadd.f32 %v278, %v421
    %v503 = vadd.f32 %v279, %v426
    %v504 = vadd.f32 %v280, %v431
    %v505 = vadd.f32 %v281, %v436
    %v506 = vadd.f32 %v282, %v441
    %v507 = vadd.f32 %v283, %v446
    %v508 = vadd.f32 %v284, %v451
    %v509 = vadd.f32 %v285, %v456
    %v510 = vadd.f32 %v286, %v461
    %v511 = vadd.f32 %v287, %v466
    %v512 = vadd.f32 %v288, %v471
    %v513 = vadd.f32 %v289, %v476
    %v514 = vadd.f32 %v290, %v481
    %v515 = vmax.f32 %v483, 0.0
    %v516 = vmax.f32 %v484, 0.0
    %v517 = vmax.f32 %v485, 0.0
    %v518 = vmax.f32 %v486, 0.0
    %v519 = vmax.f32 %v487, 0.0
    %v520 = vmax.f32 %v488, 0.0
    %v521 = vmax.f32 %v489, 0.0
    %v522 = vmax.f32 %v490, 0.0
    %v523 = vmax.f32 %v491, 0.0
    %v524 = vmax.f32 %v492, 0.0
    %v525 = vmax.f32 %v493, 0.0
    %v526 = vmax.f32 %v494, 0.0
    %v527 = vmax.f32 %v495, 0.0
    %v528 = vmax.f32 %v496, 0.0
    %v529 = vmax.f32 %v497, 0.0
    %v530 = vmax.f32 %v498, 0.0
    %v531 = vmax.f32 %v499, 0.0
    %v532 = vmax.f32 %v500, 0.0
    %v533 = vmax.f32 %v501, 0.0
    %v534 = vmax.f32 %v502, 0.0
    %v535 = vmax.f32 %v503, 0.0
    %v536 = vmax.f32 %v504, 0.0
    %v537 = vmax.f32 %v505, 0.0
    %v538 = vmax.f32 %v506, 0.0
    %v539 = vmax.f32 %v507, 0.0
    %v540 = vmax.f32 %v508, 0.0
    %v541 = vmax.f32 %v509, 0.0
    %v542 = vmax.f32 %v510, 0.0
    %v543 = vmax.f32 %v511, 0.0
    %v544 = vmax.f32 %v512, 0.0
    %v545 = vmax.f32 %v513, 0.0
    %v546 = vmax.f32 %v514, 0.0
    %v547 = vld [vmem:[%s3] sm:$0xff]
    %v548 = vld [vmem:[%s3 + $0x8] sm:$0xff]
    %v549 = vld [vmem:[%s3 + $0x10] sm:$0xff]
    %v550 = vld [vmem:[%s3 + $0x18] sm:$0xff]
    %v551 = vld [vmem:[%s3 + $0x20] sm:$0xff]
    %v552 = vld [vmem:[%s3 + $0x28] sm:$0xff]
    %v553 = vld [vmem:[%s3 + $0x30] sm:$0xff]
    %v554 = vld [vmem:[%s3 + $0x38] sm:$0xff]
    %v555 = vld [vmem:[%s3 + $0x40] sm:$0xff]
    %v556 = vld [vmem:[%s3 + $0x48] sm:$0xff]
    %v557 = vld [vmem:[%s3 + $0x50] sm:$0xff]
    %v558 = vld [vmem:[%s3 + $0x58] sm:$0xff]
    %v559 = vld [vmem:[%s3 + $0x60] sm:$0xff]
    %v560 = vld [vmem:[%s3 + $0x68] sm:$0xff]
    %v561 = vld [vmem:[%s3 + $0x70] sm:$0xff]
    %v562 = vld [vmem:[%s3 + $0x78] sm:$0xff]
    %v563 = vld [vmem:[%s3 + $0x80] sm:$0xff]
    %v564 = vld [vmem:[%s3 + $0x88] sm:$0xff]
    %v565 = vld [vmem:[%s3 + $0x90] sm:$0xff]
    %v566 = vld [vmem:[%s3 + $0x98] sm:$0xff]
    %v567 = vld [vmem:[%s3 + $0xa0] sm:$0xff]
    %v568 = vld [vmem:[%s3 + $0xa8] sm:$0xff]
    %v569 = vld [vmem:[%s3 + $0xb0] sm:$0xff]
    %v570 = vld [vmem:[%s3 + $0xb8] sm:$0xff]
    %v571 = vld [vmem:[%s3 + $0xc0] sm:$0xff]
    %v572 = vld [vmem:[%s3 + $0xc8] sm:$0xff]
    %v573 = vld [vmem:[%s3 + $0xd0] sm:$0xff]
    %v574 = vld [vmem:[%s3 + $0xd8] sm:$0xff]
    %v575 = vld [vmem:[%s3 + $0xe0] sm:$0xff]
    %v576 = vld [vmem:[%s3 + $0xe8] sm:$0xff]
    %v577 = vld [vmem:[%s3 + $0xf0] sm:$0xff]
    %v578 = vld [vmem:[%s3 + $0xf8] sm:$0xff]
    %v579 = vld [vmem:[%s3 + $0x100] sm:$0xff]
    %v580 = vld [vmem:[%s3 + $0x108] sm:$0xff]
    %v581 = vld [vmem:[%s3 + $0x110] sm:$0xff]
    %v582 = vld [vmem:[%s3 + $0x118] sm:$0xff]
    %v583 = vld [vmem:[%s3 + $0x120] sm:$0xff]
    %v584 = vld [vmem:[%s3 + $0x128] sm:$0xff]
    %v585 = vld [vmem:[%s3 + $0x130] sm:$0xff]
    %v586 = vld [vmem:[%s3 + $0x138] sm:$0xff]
    %v587 = vld [vmem:[%s3 + $0x140] sm:$0xff]
    %v588 = vld [vmem:[%s3 + $0x148] sm:$0xff]
    %v589 = vld [vmem:[%s3 + $0x150] sm:$0xff]
    %v590 = vld [vmem:[%s3 + $0x158] sm:$0xff]
    %v591 = vld [vmem:[%s3 + $0x160] sm:$0xff]
    %v592 = vld [vmem:[%s3 + $0x168] sm:$0xff]
    %v593 = vld [vmem:[%s3 + $0x170] sm:$0xff]
    %v594 = vld [vmem:[%s3 + $0x178] sm:$0xff]
    %v595 = vld [vmem:[%s3 + $0x180] sm:$0xff]
    %v596 = vld [vmem:[%s3 + $0x188] sm:$0xff]
    %v597 = vld [vmem:[%s3 + $0x190] sm:$0xff]
    %v598 = vld [vmem:[%s3 + $0x198] sm:$0xff]
    %v599 = vld [vmem:[%s3 + $0x1a0] sm:$0xff]
    %v600 = vld [vmem:[%s3 + $0x1a8] sm:$0xff]
    %v601 = vld [vmem:[%s3 + $0x1b0] sm:$0xff]
    %v602 = vld [vmem:[%s3 + $0x1b8] sm:$0xff]
    %v603 = vld [vmem:[%s3 + $0x1c0] sm:$0xff]
    %v604 = vld [vmem:[%s3 + $0x1c8] sm:$0xff]
    %v605 = vld [vmem:[%s3 + $0x1d0] sm:$0xff]
    %v606 = vld [vmem:[%s3 + $0x1d8] sm:$0xff]
    %v607 = vld [vmem:[%s3 + $0x1e0] sm:$0xff]
    %v608 = vld [vmem:[%s3 + $0x1e8] sm:$0xff]
    %v609 = vld [vmem:[%s3 + $0x1f0] sm:$0xff]
    %v610 = vld [vmem:[%s3 + $0x1f8] sm:$0xff]
    %v611 = vld [vmem:[%s4] sm:$0xff]
    %v612 = vld [vmem:[%s4 + $0x8] sm:$0xff]
    %v613 = vld [vmem:[%s4 + $0x10] sm:$0xff]
    %v614 = vld [vmem:[%s4 + $0x18] sm:$0xff]
    %v615 = vld [vmem:[%s4 + $0x20] sm:$0xff]
    %v616 = vld [vmem:[%s4 + $0x28] sm:$0xff]
    %v617 = vld [vmem:[%s4 + $0x30] sm:$0xff]
    %v618 = vld [vmem:[%s4 + $0x38] sm:$0xff]
    %v619 = vld [vmem:[%s4 + $0x40] sm:$0xff]
    %v620 = vld [vmem:[%s4 + $0x48] sm:$0xff]
    %v621 = vld [vmem:[%s4 + $0x50] sm:$0xff]
    %v622 = vld [vmem:[%s4 + $0x58] sm:$0xff]
    %v623 = vld [vmem:[%s4 + $0x60] sm:$0xff]
    %v624 = vld [vmem:[%s4 + $0x68] sm:$0xff]
    %v625 = vld [vmem:[%s4 + $0x70] sm:$0xff]
    %v626 = vld [vmem:[%s4 + $0x78] sm:$0xff]
    %v627 = vld [vmem:[%s4 + $0x80] sm:$0xff]
    %v628 = vld [vmem:[%s4 + $0x88] sm:$0xff]
    %v629 = vld [vmem:[%s4 + $0x90] sm:$0xff]
    %v630 = vld [vmem:[%s4 + $0x98] sm:$0xff]
    %v631 = vld [vmem:[%s4 + $0xa0] sm:$0xff]
    %v632 = vld [vmem:[%s4 + $0xa8] sm:$0xff]
    %v633 = vld [vmem:[%s4 + $0xb0] sm:$0xff]
    %v634 = vld [vmem:[%s4 + $0xb8] sm:$0xff]
    %v635 = vld [vmem:[%s4 + $0xc0] sm:$0xff]
    %v636 = vld [vmem:[%s4 + $0xc8] sm:$0xff]
    %v637 = vld [vmem:[%s4 + $0xd0] sm:$0xff]
    %v638 = vld [vmem:[%s4 + $0xd8] sm:$0xff]
    %v639 = vld [vmem:[%s4 + $0xe0] sm:$0xff]
    %v640 = vld [vmem:[%s4 + $0xe8] sm:$0xff]
    %v641 = vld [vmem:[%s4 + $0xf0] sm:$0xff]
    %v642 = vld [vmem:[%s4 + $0xf8] sm:$0xff]
    %644 = vset.pattern.permute.xlu0 0
    %645 = vperm.xlu0 %644, %v611
    %v646 = vpop.permute.xlu0 %645
    %649 = vset.pattern.permute.xlu0 0
    %650 = vperm.xlu0 %649, %v612
    %v651 = vpop.permute.xlu0 %650
    %654 = vset.pattern.permute.xlu0 0
    %655 = vperm.xlu0 %654, %v613
    %v656 = vpop.permute.xlu0 %655
    %659 = vset.pattern.permute.xlu0 0
    %660 = vperm.xlu0 %659, %v614
    %v661 = vpop.permute.xlu0 %660
    %664 = vset.pattern.permute.xlu0 0
    %665 = vperm.xlu0 %664, %v615
    %v666 = vpop.permute.xlu0 %665
    %669 = vset.pattern.permute.xlu0 0
    %670 = vperm.xlu0 %669, %v616
    %v671 = vpop.permute.xlu0 %670
    %674 = vset.pattern.permute.xlu0 0
    %675 = vperm.xlu0 %674, %v617
    %v676 = vpop.permute.xlu0 %675
    %679 = vset.pattern.permute.xlu0 0
    %680 = vperm.xlu0 %679, %v618
    %v681 = vpop.permute.xlu0 %680
    %684 = vset.pattern.permute.xlu0 0
    %685 = vperm.xlu0 %684, %v619
    %v686 = vpop.permute.xlu0 %685
    %689 = vset.pattern.permute.xlu0 0
    %690 = vperm.xlu0 %689, %v620
    %v691 = vpop.permute.xlu0 %690
    %694 = vset.pattern.permute.xlu0 0
    %695 = vperm.xlu0 %694, %v621
    %v696 = vpop.permute.xlu0 %695
    %699 = vset.pattern.permute.xlu0 0
    %700 = vperm.xlu0 %699, %v622
    %v701 = vpop.permute.xlu0 %700
    %704 = vset.pattern.permute.xlu0 0
    %705 = vperm.xlu0 %704, %v623
    %v706 = vpop.permute.xlu0 %705
    %709 = vset.pattern.permute.xlu0 0
    %710 = vperm.xlu0 %709, %v624
    %v711 = vpop.permute.xlu0 %710
    %714 = vset.pattern.permute.xlu0 0
    %715 = vperm.xlu0 %714, %v625
    %v716 = vpop.permute.xlu0 %715
    %719 = vset.pattern.permute.xlu0 0
    %720 = vperm.xlu0 %719, %v626
    %v721 = vpop.permute.xlu0 %720
    %724 = vset.pattern.permute.xlu0 0
    %725 = vperm.xlu0 %724, %v627
    %v726 = vpop.permute.xlu0 %725
    %729 = vset.pattern.permute.xlu0 0
    %730 = vperm.xlu0 %729, %v628
    %v731 = vpop.permute.xlu0 %730
    %734 = vset.pattern.permute.xlu0 0
    %735 = vperm.xlu0 %734, %v629
    %v736 = vpop.permute.xlu0 %735
    %739 = vset.pattern.permute.xlu0 0
    %740 = vperm.xlu0 %739, %v630
    %v741 = vpop.permute.xlu0 %740
    %744 = vset.pattern.permute.xlu0 0
    %745 = vperm.xlu0 %744, %v631
    %v746 = vpop.permute.xlu0 %745
    %749 = vset.pattern.permute.xlu0 0
    %750 = vperm.xlu0 %749, %v632
    %v751 = vpop.permute.xlu0 %750
    %754 = vset.pattern.permute.xlu0 0
    %755 = vperm.xlu0 %754, %v633
    %v756 = vpop.permute.xlu0 %755
    %759 = vset.pattern.permute.xlu0 0
    %760 = vperm.xlu0 %759, %v634
    %v761 = vpop.permute.xlu0 %760
    %764 = vset.pattern.permute.xlu0 0
    %765 = vperm.xlu0 %764, %v635
    %v766 = vpop.permute.xlu0 %765
    %769 = vset.pattern.permute.xlu0 0
    %770 = vperm.xlu0 %769, %v636
    %v771 = vpop.permute.xlu0 %770
    %774 = vset.pattern.permute.xlu0 0
    %775 = vperm.xlu0 %774, %v637
    %v776 = vpop.permute.xlu0 %775
    %779 = vset.pattern.permute.xlu0 0
    %780 = vperm.xlu0 %779, %v638
    %v781 = vpop.permute.xlu0 %780
    %784 = vset.pattern.permute.xlu0 0
    %785 = vperm.xlu0 %784, %v639
    %v786 = vpop.permute.xlu0 %785
    %789 = vset.pattern.permute.xlu0 0
    %790 = vperm.xlu0 %789, %v640
    %v791 = vpop.permute.xlu0 %790
    %794 = vset.pattern.permute.xlu0 0
    %795 = vperm.xlu0 %794, %v641
    %v796 = vpop.permute.xlu0 %795
    %799 = vset.pattern.permute.xlu0 0
    %800 = vperm.xlu0 %799, %v642
    %v801 = vpop.permute.xlu0 %800
    %803 = vmatprep.subr.mxu0 0.0
    %804 = vmatpush1.msra.mxu0 %v515
    %805 = vmatprep.subr.mxu0 0.0
    %806 = vmatpush1.msra.mxu0 %v516
    %807 = vmatprep.subr.mxu0 0.0
    %808 = vmatpush1.msra.mxu0 %v517
    %809 = vmatprep.subr.mxu0 0.0
    %810 = vmatpush1.msra.mxu0 %v518
    %811 = vmatprep.subr.mxu0 0.0
    %812 = vmatpush1.msra.mxu0 %v519
    %813 = vmatprep.subr.mxu0 0.0
    %814 = vmatpush1.msra.mxu0 %v520
    %815 = vmatprep.subr.mxu0 0.0
    %816 = vmatpush1.msra.mxu0 %v521
    %817 = vmatprep.subr.mxu0 0.0
    %818 = vmatpush1.msra.mxu0 %v522
    %819 = vmatprep.subr.mxu0 0.0
    %820 = vmatpush1.msra.mxu0 %v523
    %821 = vmatprep.subr.mxu0 0.0
    %822 = vmatpush1.msra.mxu0 %v524
    %823 = vmatprep.subr.mxu0 0.0
    %824 = vmatpush1.msra.mxu0 %v525
    %825 = vmatprep.subr.mxu0 0.0
    %826 = vmatpush1.msra.mxu0 %v526
    %827 = vmatprep.subr.mxu0 0.0
    %828 = vmatpush1.msra.mxu0 %v527
    %829 = vmatprep.subr.mxu0 0.0
    %830 = vmatpush1.msra.mxu0 %v528
    %831 = vmatprep.subr.mxu0 0.0
    %832 = vmatpush1.msra.mxu0 %v529
    %833 = vmatprep.subr.mxu0 0.0
    %834 = vmatpush1.msra.mxu0 %v530
    %835 = vmatprep.subr.mxu0 0.0
    %836 = vmatpush1.msra.mxu0 %v531
    %837 = vmatprep.subr.mxu0 0.0
    %838 = vmatpush1.msra.mxu0 %v532
    %839 = vmatprep.subr.mxu0 0.0
    %840 = vmatpush1.msra.mxu0 %v533
    %841 = vmatprep.subr.mxu0 0.0
    %842 = vmatpush1.msra.mxu0 %v534
    %843 = vmatprep.subr.mxu0 0.0
    %844 = vmatpush1.msra.mxu0 %v535
    %845 = vmatprep.subr.mxu0 0.0
    %846 = vmatpush1.msra.mxu0 %v536
    %847 = vmatprep.subr.mxu0 0.0
    %848 = vmatpush1.msra.mxu0 %v537
    %849 = vmatprep.subr.mxu0 0.0
    %850 = vmatpush1.msra.mxu0 %v538
    %851 = vmatprep.subr.mxu0 0.0
    %852 = vmatpush1.msra.mxu0 %v539
    %853 = vmatprep.subr.mxu0 0.0
    %854 = vmatpush1.msra.mxu0 %v540
    %855 = vmatprep.subr.mxu0 0.0
    %856 = vmatpush1.msra.mxu0 %v541
    %857 = vmatprep.subr.mxu0 0.0
    %858 = vmatpush1.msra.mxu0 %v542
    %859 = vmatprep.subr.mxu0 0.0
    %860 = vmatpush1.msra.mxu0 %v543
    %861 = vmatprep.subr.mxu0 0.0
    %862 = vmatpush1.msra.mxu0 %v544
    %863 = vmatprep.subr.mxu0 0.0
    %864 = vmatpush1.msra.mxu0 %v545
    %865 = vmatprep.subr.mxu0 0.0
    %866 = vmatpush1.msra.mxu0 %v546
    %867 = vmatprep.mubr.f32.mxu0 %v548
    %868 = vmatmul.mubr.f32.gmra.mrb[0].mxu0 %v547
    %v869 = vpop.f32.mrb[0].mxu0
    %v870 = vadd.f32 %v646, %v869
    %v871 = vpop.f32.mrb[0].mxu0
    %872 = vmatprep.mubr.f32.mxu0 %v550
    %873 = vmatmul.mubr.f32.gmra.mrb[0].mxu0 %v549
    %v874 = vpop.f32.mrb[0].mxu0
    %v875 = vadd.f32 %v651, %v874
    %v876 = vpop.f32.mrb[0].mxu0
    %877 = vmatprep.mubr.f32.mxu0 %v552
    %878 = vmatmul.mubr.f32.gmra.mrb[0].mxu0 %v551
    %v879 = vpop.f32.mrb[0].mxu0
    %v880 = vadd.f32 %v656, %v879
    %v881 = vpop.f32.mrb[0].mxu0
    %882 = vmatprep.mubr.f32.mxu0 %v554
    %883 = vmatmul.mubr.f32.gmra.mrb[0].mxu0 %v553
    %v884 = vpop.f32.mrb[0].mxu0
    %v885 = vadd.f32 %v661, %v884
    %v886 = vpop.f32.mrb[0].mxu0
    %887 = vmatprep.mubr.f32.mxu0 %v556
    %888 = vmatmul.mubr.f32.gmra.mrb[0].mxu0 %v555
    %v889 = vpop.f32.mrb[0].mxu0
    %v890 = vadd.f32 %v666, %v889
    %v891 = vpop.f32.mrb[0].mxu0
    %892 = vmatprep.mubr.f32.mxu0 %v558
    %893 = vmatmul.mubr.f32.gmra.mrb[0].mxu0 %v557
    %v894 = vpop.f32.mrb[0].mxu0
    %v895 = vadd.f32 %v671, %v894
    %v896 = vpop.f32.mrb[0].mxu0
    %897 = vmatprep.mubr.f32.mxu0 %v560
    %898 = vmatmul.mubr.f32.gmra.mrb[0].mxu0 %v559
    %v899 = vpop.f32.mrb[0].mxu0
    %v900 = vadd.f32 %v676, %v899
    %v901 = vpop.f32.mrb[0].mxu0
    %902 = vmatprep.mubr.f32.mxu0 %v562
    %903 = vmatmul.mubr.f32.gmra.mrb[0].mxu0 %v561
    %v904 = vpop.f32.mrb[0].mxu0
    %v905 = vadd.f32 %v681, %v904
    %v906 = vpop.f32.mrb[0].mxu0
    %907 = vmatprep.mubr.f32.mxu0 %v564
    %908 = vmatmul.mubr.f32.gmra.mrb[0].mxu0 %v563
    %v909 = vpop.f32.mrb[0].mxu0
    %v910 = vadd.f32 %v686, %v909
    %v911 = vpop.f32.mrb[0].mxu0
    %912 = vmatprep.mubr.f32.mxu0 %v566
    %913 = vmatmul.mubr.f32.gmra.mrb[0].mxu0 %v565
    %v914 = vpop.f32.mrb[0].mxu0
    %v915 = vadd.f32 %v691, %v914
    %v916 = vpop.f32.mrb[0].mxu0
    %917 = vmatprep.mubr.f32.mxu0 %v568
    %918 = vmatmul.mubr.f32.gmra.mrb[0].mxu0 %v567
    %v919 = vpop.f32.mrb[0].mxu0
    %v920 = vadd.f32 %v696, %v919
    %v921 = vpop.f32.mrb[0].mxu0
    %922 = vmatprep.mubr.f32.mxu0 %v570
    %923 = vmatmul.mubr.f32.gmra.mrb[0].mxu0 %v569
    %v924 = vpop.f32.mrb[0].mxu0
    %v925 = vadd.f32 %v701, %v924
    %v926 = vpop.f32.mrb[0].mxu0
    %927 = vmatprep.mubr.f32.mxu0 %v572
    %928 = vmatmul.mubr.f32.gmra.mrb[0].mxu0 %v571
    %v929 = vpop.f32.mrb[0].mxu0
    %v930 = vadd.f32 %v706, %v929
    %v931 = vpop.f32.mrb[0].mxu0
    %932 = vmatprep.mubr.f32.mxu0 %v574
    %933 = vmatmul.mubr.f32.gmra.mrb[0].mxu0 %v573
    %v934 = vpop.f32.mrb[0].mxu0
    %v935 = vadd.f32 %v711, %v934
    %v936 = vpop.f32.mrb[0].mxu0
    %937 = vmatprep.mubr.f32.mxu0 %v576
    %938 = vmatmul.mubr.f32.gmra.mrb[0].mxu0 %v575
    %v939 = vpop.f32.mrb[0].mxu0
    %v940 = vadd.f32 %v716, %v939
    %v941 = vpop.f32.mrb[0].mxu0
    %942 = vmatprep.mubr.f32.mxu0 %v578
    %943 = vmatmul.mubr.f32.gmra.mrb[0].mxu0 %v577
    %v944 = vpop.f32.mrb[0].mxu0
    %v945 = vadd.f32 %v721, %v944
    %v946 = vpop.f32.mrb[0].mxu0
    %947 = vmatprep.mubr.f32.mxu0 %v580
    %948 = vmatmul.mubr.f32.gmra.mrb[0].mxu0 %v579
    %v949 = vpop.f32.mrb[0].mxu0
    %v950 = vadd.f32 %v726, %v949
    %v951 = vpop.f32.mrb[0].mxu0
    %952 = vmatprep.mubr.f32.mxu0 %v582
    %953 = vmatmul.mubr.f32.gmra.mrb[0].mxu0 %v581
    %v954 = vpop.f32.mrb[0].mxu0
    %v955 = vadd.f32 %v731, %v954
    %v956 = vpop.f32.mrb[0].mxu0
    %957 = vmatprep.mubr.f32.mxu0 %v584
    %958 = vmatmul.mubr.f32.gmra.mrb[0].mxu0 %v583
    %v959 = vpop.f32.mrb[0].mxu0
    %v960 = vadd.f32 %v736, %v959
    %v961 = vpop.f32.mrb[0].mxu0
    %962 = vmatprep.mubr.f32.mxu0 %v586
    %963 = vmatmul.mubr.f32.gmra.mrb[0].mxu0 %v585
    %v964 = vpop.f32.mrb[0].mxu0
    %v965 = vadd.f32 %v741, %v964
    %v966 = vpop.f32.mrb[0].mxu0
    %967 = vmatprep.mubr.f32.mxu0 %v588
    %968 = vmatmul.mubr.f32.gmra.mrb[0].mxu0 %v587
    %v969 = vpop.f32.mrb[0].mxu0
    %v970 = vadd.f32 %v746, %v969
    %v971 = vpop.f32.mrb[0].mxu0
    %972 = vmatprep.mubr.f32.mxu0 %v590
    %973 = vmatmul.mubr.f32.gmra.mrb[0].mxu0 %v589
    %v974 = vpop.f32.mrb[0].mxu0
    %v975 = vadd.f32 %v751, %v974
    %v976 = vpop.f32.mrb[0].mxu0
    %977 = vmatprep.mubr.f32.mxu0 %v592
    %978 = vmatmul.mubr.f32.gmra.mrb[0].mxu0 %v591
    %v979 = vpop.f32.mrb[0].mxu0
    %v980 = vadd.f32 %v756, %v979
    %v981 = vpop.f32.mrb[0].mxu0
    %982 = vmatprep.mubr.f32.mxu0 %v594
    %983 = vmatmul.mubr.f32.gmra.mrb[0].mxu0 %v593
    %v984 = vpop.f32.mrb[0].mxu0
    %v985 = vadd.f32 %v761, %v984
    %v986 = vpop.f32.mrb[0].mxu0
    %987 = vmatprep.mubr.f32.mxu0 %v596
    %988 = vmatmul.mubr.f32.gmra.mrb[0].mxu0 %v595
    %v989 = vpop.f32.mrb[0].mxu0
    %v990 = vadd.f32 %v766, %v989
    %v991 = vpop.f32.mrb[0].mxu0
    %992 = vmatprep.mubr.f32.mxu0 %v598
    %993 = vmatmul.mubr.f32.gmra.mrb[0].mxu0 %v597
    %v994 = vpop.f32.mrb[0].mxu0
    %v995 = vadd.f32 %v771, %v994
    %v996 = vpop.f32.mrb[0].mxu0
    %997 = vmatprep.mubr.f32.mxu0 %v600
    %998 = vmatmul.mubr.f32.gmra.mrb[0].mxu0 %v599
    %v999 = vpop.f32.mrb[0].mxu0
    %v1000 = vadd.f32 %v776, %v999
    %v1001 = vpop.f32.mrb[0].mxu0
    %1002 = vmatprep.mubr.f32.mxu0 %v602
    %1003 = vmatmul.mubr.f32.gmra.mrb[0].mxu0 %v601
    %v1004 = vpop.f32.mrb[0].mxu0
    %v1005 = vadd.f32 %v781, %v1004
    %v1006 = vpop.f32.mrb[0].mxu0
    %1007 = vmatprep.mubr.f32.mxu0 %v604
    %1008 = vmatmul.mubr.f32.gmra.mrb[0].mxu0 %v603
    %v1009 = vpop.f32.mrb[0].mxu0
    %v1010 = vadd.f32 %v786, %v1009
    %v1011 = vpop.f32.mrb[0].mxu0
    %1012 = vmatprep.mubr.f32.mxu0 %v606
    %1013 = vmatmul.mubr.f32.gmra.mrb[0].mxu0 %v605
    %v1014 = vpop.f32.mrb[0].mxu0
    %v1015 = vadd.f32 %v791, %v1014
    %v1016 = vpop.f32.mrb[0].mxu0
    %1017 = vmatprep.mubr.f32.mxu0 %v608
    %1018 = vmatmul.mubr.f32.gmra.mrb[0].mxu0 %v607
    %v1019 = vpop.f32.mrb[0].mxu0
    %v1020 = vadd.f32 %v796, %v1019
    %v1021 = vpop.f32.mrb[0].mxu0
    %1022 = vmatprep.mubr.f32.mxu0 %v610
    %1023 = vmatmul.mubr.f32.gmra.mrb[0].mxu0 %v609
    %v1024 = vpop.f32.mrb[0].mxu0
    %v1025 = vadd.f32 %v801, %v1024
    %v1026 = vpop.f32.mrb[0].mxu0
    %1027 = vdwg.mxu0
    %v1028 = vmax.f32 %v870, 0.0
    %v1029 = vmax.f32 %v875, 0.0
    %v1030 = vmax.f32 %v880, 0.0
    %v1031 = vmax.f32 %v885, 0.0
    %v1032 = vmax.f32 %v890, 0.0
    %v1033 = vmax.f32 %v895, 0.0
    %v1034 = vmax.f32 %v900, 0.0
    %v1035 = vmax.f32 %v905, 0.0
    %v1036 = vmax.f32 %v910, 0.0
    %v1037 = vmax.f32 %v915, 0.0
    %v1038 = vmax.f32 %v920, 0.0
    %v1039 = vmax.f32 %v925, 0.0
    %v1040 = vmax.f32 %v930, 0.0
    %v1041 = vmax.f32 %v935, 0.0
    %v1042 = vmax.f32 %v940, 0.0
    %v1043 = vmax.f32 %v945, 0.0
    %v1044 = vmax.f32 %v950, 0.0
    %v1045 = vmax.f32 %v955, 0.0
    %v1046 = vmax.f32 %v960, 0.0
    %v1047 = vmax.f32 %v965, 0.0
    %v1048 = vmax.f32 %v970, 0.0
    %v1049 = vmax.f32 %v975, 0.0
    %v1050 = vmax.f32 %v980, 0.0
    %v1051 = vmax.f32 %v985, 0.0
    %v1052 = vmax.f32 %v990, 0.0
    %v1053 = vmax.f32 %v995, 0.0
    %v1054 = vmax.f32 %v1000, 0.0
    %v1055 = vmax.f32 %v1005, 0.0
    %v1056 = vmax.f32 %v1010, 0.0
    %v1057 = vmax.f32 %v1015, 0.0
    %v1058 = vmax.f32 %v1020, 0.0
    %v1059 = vmax.f32 %v1025, 0.0
    %v1060 = vld [vmem:[%s5] sm:$0xff]
    %v1061 = vld [vmem:[%s5 + $0x8] sm:$0xff]
    %v1062 = vld [vmem:[%s6] sm:$0xff]
    %1064 = vset.pattern.permute.xlu0 0
    %1065 = vperm.xlu0 %1064, %v1062
    %v1066 = vpop.permute.xlu0 %1065
    %1068 = vmatprep.subr.mxu0 0.0
    %1069 = vmatpush1.msra.mxu0 %v1028
    %1070 = vmatprep.subr.mxu0 0.0
    %1071 = vmatpush1.msra.mxu0 %v1029
    %1072 = vmatprep.subr.mxu0 0.0
    %1073 = vmatpush1.msra.mxu0 %v1030
    %1074 = vmatprep.subr.mxu0 0.0
    %1075 = vmatpush1.msra.mxu0 %v1031
    %1076 = vmatprep.subr.mxu0 0.0
    %1077 = vmatpush1.msra.mxu0 %v1032
    %1078 = vmatprep.subr.mxu0 0.0
    %1079 = vmatpush1.msra.mxu0 %v1033
    %1080 = vmatprep.subr.mxu0 0.0
    %1081 = vmatpush1.msra.mxu0 %v1034
    %1082 = vmatprep.subr.mxu0 0.0
    %1083 = vmatpush1.msra.mxu0 %v1035
    %1084 = vmatprep.subr.mxu0 0.0
    %1085 = vmatpush1.msra.mxu0 %v1036
    %1086 = vmatprep.subr.mxu0 0.0
    %1087 = vmatpush1.msra.mxu0 %v1037
    %1088 = vmatprep.subr.mxu0 0.0
    %1089 = vmatpush1.msra.mxu0 %v1038
    %1090 = vmatprep.subr.mxu0 0.0
    %1091 = vmatpush1.msra.mxu0 %v1039
    %1092 = vmatprep.subr.mxu0 0.0
    %1093 = vmatpush1.msra.mxu0 %v1040
    %1094 = vmatprep.subr.mxu0 0.0
    %1095 = vmatpush1.msra.mxu0 %v1041
    %1096 = vmatprep.subr.mxu0 0.0
    %1097 = vmatpush1.msra.mxu0 %v1042
    %1098 = vmatprep.subr.mxu0 0.0
    %1099 = vmatpush1.msra.mxu0 %v1043
    %1100 = vmatprep.subr.mxu0 0.0
    %1101 = vmatpush1.msra.mxu0 %v1044
    %1102 = vmatprep.subr.mxu0 0.0
    %1103 = vmatpush1.msra.mxu0 %v1045
    %1104 = vmatprep.subr.mxu0 0.0
    %1105 = vmatpush1.msra.mxu0 %v1046
    %1106 = vmatprep.subr.mxu0 0.0
    %1107 = vmatpush1.msra.mxu0 %v1047
    %1108 = vmatprep.subr.mxu0 0.0
    %1109 = vmatpush1.msra.mxu0 %v1048
    %1110 = vmatprep.subr.mxu0 0.0
    %1111 = vmatpush1.msra.mxu0 %v1049
    %1112 = vmatprep.subr.mxu0 0.0
    %1113 = vmatpush1.msra.mxu0 %v1050
    %1114 = vmatprep.subr.mxu0 0.0
    %1115 = vmatpush1.msra.mxu0 %v1051
    %1116 = vmatprep.subr.mxu0 0.0
    %1117 = vmatpush1.msra.mxu0 %v1052
    %1118 = vmatprep.subr.mxu0 0.0
    %1119 = vmatpush1.msra.mxu0 %v1053
    %1120 = vmatprep.subr.mxu0 0.0
    %1121 = vmatpush1.msra.mxu0 %v1054
    %1122 = vmatprep.subr.mxu0 0.0
    %1123 = vmatpush1.msra.mxu0 %v1055
    %1124 = vmatprep.subr.mxu0 0.0
    %1125 = vmatpush1.msra.mxu0 %v1056
    %1126 = vmatprep.subr.mxu0 0.0
    %1127 = vmatpush1.msra.mxu0 %v1057
    %1128 = vmatprep.subr.mxu0 0.0
    %1129 = vmatpush1.msra.mxu0 %v1058
    %1130 = vmatprep.subr.mxu0 0.0
    %1131 = vmatpush1.msra.mxu0 %v1059
    %1132 = vmatprep.mubr.f32.mxu0 %v1061
    %1133 = vmatmul.mubr.f32.gmra.mrb[0].mxu0 %v1060
    %v1134 = vpop.f32.mrb[0].mxu0
    %v1135 = vadd.f32 %v1066, %v1134
    %v1136 = vpop.f32.mrb[0].mxu0
    %1137 = vdwg.mxu0
    %1138 = vst [vmem:[#allocation2] sm:$0xff] %v1135
    // Predicated region
    $region30: #{tpu_custom_call.1} parent=1 // pred_check
      _
    $region31: #{tpu_custom_call.1} parent=1 // pred_check_branch
      %1140 = sbr.rel (0) target = $region33
    $region32: #{tpu_custom_call.1} parent=1 // pred_region
      %s1142 = ssub.s32 128, 128
      %1143 = vsyncadd [#allocation3], %s1142
      %s1145 = sshll.u32 [#allocation2], 4
      %s1146 = int_to_ptr.vmem [resolvable:$true] %s1145
      %1148 = dma.vmem_to_hbm [thread:$0]  %s1146, 128, %s7, [#allocation3]
    $region33: #{tpu_custom_call.1} parent=1 // pred_fallthru
      _
    // Predicated region
    $region34: #{tpu_custom_call.1} parent=1 // pred_check
      _
    $region35: #{tpu_custom_call.1} parent=1 // pred_check_branch
      %1150 = sbr.rel (0) target = $region37
    $region36: #{tpu_custom_call.1} parent=1 // pred_region
      %1151 = dma.done [#allocation3], 128
    $region37: #{tpu_custom_call.1} parent=1 // pred_fallthru
      _
    %1152 = vsyncpa [#allocation3], 1

</llo_original>
